<compile_context>
chip_gen: v5e
topology: v5e:2x2
jax: 0.10.0
libtpu: 0.0.40
codegen_flags: <defaults>
</compile_context>

<pallas_src>
import functools

import jax
import jax.numpy as jnp
from jax.experimental import pallas as pl
from jax.experimental.pallas import tpu as pltpu


LANES = 128
# ~2 MiB per input block per pipeline buffer.
MAX_BLOCK_BYTES = 2 * 1024 * 1024
# Strip-mine the in-block reduction in 256-row chunks (128 KiB f32 per operand)
# so live values stay bounded regardless of block size.
CHUNK_ROWS = 256


def _sublane_multiple(dtype):
    # Packed-tile minimum second-minor dim: f32 -> 8, bf16 -> 16, int8 -> 32.
    return max(8, 32 // jnp.dtype(dtype).itemsize)


def _device_kind():
    try:
        return jax.devices()[0].device_kind.lower()
    except Exception:  # pragma: no cover
        return ""


def _num_tensorcores():
    # v7x has 2 TensorCores per chip; v5e/v6e have 1.  A fake 2-way core axis
    # on single-TC chips is pure overhead, so make it device dependent.
    kind = _device_kind()
    return 2 if ("v7" in kind or "tpu7" in kind) else 1


def _native_bf16_vpu():
    kind = _device_kind()
    return ("v6" in kind) or ("v7" in kind) or ("tpu7" in kind)


def _iou_partial_kernel(yp_ref, yh_ref, out_ref, inter_acc, total_acc, *,
                        block_rows, blocks_per_core, compute_dtype):
    i = pl.program_id(1)   # reduction axis (sequential per core)

    @pl.when(i == 0)
    def _():
        inter_acc[...] = jnp.zeros_like(inter_acc)
        total_acc[...] = jnp.zeros_like(total_acc)

    # Strip-mined per-lane partial sums over this block (static chunk loop,
    # static slices -> no dynamic-index overhead, bounded live ranges).
    inter = jnp.zeros((1, LANES), jnp.float32)
    total = jnp.zeros((1, LANES), jnp.float32)
    r0 = 0
    while r0 < block_rows:
        rows = min(CHUNK_ROWS, block_rows - r0)
        p = yp_ref[r0:r0 + rows, :].astype(compute_dtype)
        h = yh_ref[r0:r0 + rows, :].astype(compute_dtype)
        inter = inter + jnp.sum((p * h).astype(jnp.float32), axis=0,
                                keepdims=True)
        total = total + jnp.sum((p + h).astype(jnp.float32), axis=0,
                                keepdims=True)
        r0 += rows

    inter_acc[...] += inter
    total_acc[...] += total

    @pl.when(i == blocks_per_core - 1)
    def _():
        # Single fused lane-dense (2, 128) store per core.
        out_ref[0:1, :] = inter_acc[...]
        out_ref[1:2, :] = total_acc[...]


def iou_loss(y_pred, y_hat, smooth=1.0):
    """Pallas implementation of IoULoss.forward. Returns a float32 scalar."""
    yp = jnp.ravel(y_pred)
    yh = jnp.ravel(y_hat)
    n = yp.shape[0]
    assert yh.shape[0] == n, "y_pred and y_hat must have the same element count"

    if yp.dtype == jnp.bool_:
        yp = yp.astype(jnp.float32)
    if yh.dtype == jnp.bool_:
        yh = yh.astype(jnp.float32)

    quantum = max(_sublane_multiple(yp.dtype), _sublane_multiple(yh.dtype))
    itemsize = max(jnp.dtype(yp.dtype).itemsize, jnp.dtype(yh.dtype).itemsize)
    max_block_rows = MAX_BLOCK_BYTES // (LANES * itemsize)

    full_rows = n // LANES
    block_rows = min(max_block_rows, (full_rows // quantum) * quantum)

    inter = jnp.zeros((), jnp.float32)
    total = jnp.zeros((), jnp.float32)
    rows_kernel = 0

    if block_rows > 0:
        grid_blocks = full_rows // block_rows
        num_cores = _num_tensorcores()
        if grid_blocks < num_cores or grid_blocks % num_cores:
            num_cores = 1
        blocks_per_core = grid_blocks // num_cores
        rows_kernel = grid_blocks * block_rows

        # Free (layout-preserving) reshape when n % 128 == 0; only the rare
        # ragged case pays a prefix-slice copy (still cheaper than jnp.pad on
        # both inputs).
        yp2 = yp[:full_rows * LANES].reshape(full_rows, LANES)
        yh2 = yh[:full_rows * LANES].reshape(full_rows, LANES)

        compute_dtype = jnp.float32
        if (yp2.dtype == jnp.bfloat16 and yh2.dtype == jnp.bfloat16
                and _native_bf16_vpu()):
            compute_dtype = jnp.bfloat16

        kernel = functools.partial(
            _iou_partial_kernel,
            block_rows=block_rows,
            blocks_per_core=blocks_per_core,
            compute_dtype=compute_dtype,
        )

        def in_index_map(c, i):
            return (c * blocks_per_core + i, 0)

        partials = pl.pallas_call(
            kernel,
            out_shape=jax.ShapeDtypeStruct((num_cores, 2, LANES), jnp.float32),
            grid_spec=pltpu.PrefetchScalarGridSpec(
                num_scalar_prefetch=0,
                grid=(num_cores, blocks_per_core),
                in_specs=[
                    pl.BlockSpec((block_rows, LANES), in_index_map),
                    pl.BlockSpec((block_rows, LANES), in_index_map),
                ],
                out_specs=pl.BlockSpec((None, 2, LANES), lambda c, i: (c, 0, 0)),
                scratch_shapes=[
                    pltpu.VMEM((1, LANES), jnp.float32),
                    pltpu.VMEM((1, LANES), jnp.float32),
                ],
            ),
            compiler_params=pltpu.CompilerParams(
                # TODO(synk): on v7x verify the leading "parallel" axis really
                # shards across the 2 TensorCores; if not, switch it to
                # pltpu.CORE_PARALLEL.
                dimension_semantics=("parallel", "arbitrary"),
                vmem_limit_bytes=32 * 1024 * 1024,
            ),
        )(yp2, yh2)

        inter = inter + jnp.sum(partials[:, 0, :])
        total = total + jnp.sum(partials[:, 1, :])

    # Ragged tail (< one block of rows plus the n % 128 remainder): a one-off
    # plain-XLA reduction beats HBM padding or per-step in-kernel masking.
    tail_start = rows_kernel * LANES
    if tail_start < n:
        tp = yp[tail_start:].astype(jnp.float32)
        th = yh[tail_start:].astype(jnp.float32)
        inter = inter + jnp.sum(tp * th)
        total = total + jnp.sum(tp + th)

    union = total - inter
    iou = (inter + smooth) / (union + smooth)
    return (1.0 - iou).astype(jnp.float32)


if __name__ == "__main__":
    key = jax.random.PRNGKey(0)
    k1, k2 = jax.random.split(key)

    # Small NCHW-like shapes consistent with a segmentation-mask loss.
    y_pred = jax.random.uniform(k1, (2, 4, 16, 16), dtype=jnp.float32)
    y_hat = (jax.random.uniform(k2, (2, 4, 16, 16)) > 0.5).astype(jnp.float32)

    loss = iou_loss(y_pred, y_hat, smooth=1.0)
    loss = jax.block_until_ready(loss)

    # Pure-JAX reference for sanity.
    yp = y_pred.reshape(-1)
    yh = y_hat.reshape(-1)
    ref_inter = jnp.sum(yp * yh)
    ref_total = jnp.sum(yp + yh)
    ref = 1.0 - (ref_inter + 1.0) / (ref_total - ref_inter + 1.0)

    assert jnp.allclose(loss, ref, rtol=1e-5, atol=1e-5), (loss, ref)
    print("KERNEL_OK")
</pallas_src>

<mosaic_0001>
module attributes {stable_mosaic.version = 11 : i64} {
  func.func @_iou_partial_kernel(%arg0: i32, %arg1: i32, %arg2: memref<16x128xf32, #tpu.memory_space<vmem>>, %arg3: memref<16x128xf32, #tpu.memory_space<vmem>>, %arg4: memref<1x2x128xf32, #tpu.memory_space<vmem>>, %arg5: memref<1x128xf32, #tpu.memory_space<vmem>>, %arg6: memref<1x128xf32, #tpu.memory_space<vmem>>) attributes {dimension_semantics = [#tpu.dimension_semantics<parallel>, #tpu.dimension_semantics<arbitrary>], iteration_bounds = array<i64: 1, 1>, scalar_prefetch = 0 : i64, scratch_operands = 2 : i64, tpu.core_type = #tpu.core_type<tc>, window_params = [{transform_indices = @transform_0, window_bounds = array<i64: 16, 128>}, {transform_indices = @transform_1, window_bounds = array<i64: 16, 128>}, {transform_indices = @transform_2, window_bounds = array<i64: 1, 2, 128>}]} {
    %c0_i32 = arith.constant 0 : i32
    %0 = arith.cmpi eq, %arg1, %c0_i32 : i32
    %1 = arith.extui %0 : i1 to i32
    %c0_i32_0 = arith.constant 0 : i32
    %2 = arith.cmpi ne, %1, %c0_i32_0 : i32
    scf.if %2 {
      %cst_17 = arith.constant 0.000000e+00 : f32
      %24 = vector.broadcast %cst_17 : f32 to vector<1x128xf32>
      %c0_18 = arith.constant 0 : index
      %c0_19 = arith.constant 0 : index
      %25 = vector.load %arg5[%c0_18, %c0_19] : memref<1x128xf32, #tpu.memory_space<vmem>>, vector<1x128xf32>
      tpu.vector_store %arg5[%c0_18, %c0_19], %24 {strides = array<i32>} : memref<1x128xf32, #tpu.memory_space<vmem>>, vector<1x128xf32>,
      %cst_20 = arith.constant 0.000000e+00 : f32
      %26 = vector.broadcast %cst_20 : f32 to vector<1x128xf32>
      %c0_21 = arith.constant 0 : index
      %c0_22 = arith.constant 0 : index
      %27 = vector.load %arg6[%c0_21, %c0_22] : memref<1x128xf32, #tpu.memory_space<vmem>>, vector<1x128xf32>
      tpu.vector_store %arg6[%c0_21, %c0_22], %26 {strides = array<i32>} : memref<1x128xf32, #tpu.memory_space<vmem>>, vector<1x128xf32>,
    } else {
    }
    %cst = arith.constant 0.000000e+00 : f32
    %3 = vector.broadcast %cst : f32 to vector<1x128xf32>
    %cst_1 = arith.constant 0.000000e+00 : f32
    %4 = vector.broadcast %cst_1 : f32 to vector<1x128xf32>
    %c0 = arith.constant 0 : index
    %c0_2 = arith.constant 0 : index
    %5 = vector.load %arg2[%c0, %c0_2] : memref<16x128xf32, #tpu.memory_space<vmem>>, vector<16x128xf32>
    %c0_3 = arith.constant 0 : index
    %c0_4 = arith.constant 0 : index
    %6 = vector.load %arg3[%c0_3, %c0_4] : memref<16x128xf32, #tpu.memory_space<vmem>>, vector<16x128xf32>
    %7 = arith.mulf %5, %6 : vector<16x128xf32>
    %cst_5 = arith.constant dense<0.000000e+00> : vector<128xf32>
    %8 = vector.multi_reduction <add>, %7, %cst_5 [0] : vector<16x128xf32> to vector<128xf32>
    %9 = vector.shape_cast %8 : vector<128xf32> to vector<1x128xf32>
    %10 = arith.addf %3, %9 : vector<1x128xf32>
    %11 = arith.addf %5, %6 : vector<16x128xf32>
    %cst_6 = arith.constant dense<0.000000e+00> : vector<128xf32>
    %12 = vector.multi_reduction <add>, %11, %cst_6 [0] : vector<16x128xf32> to vector<128xf32>
    %13 = vector.shape_cast %12 : vector<128xf32> to vector<1x128xf32>
    %14 = arith.addf %4, %13 : vector<1x128xf32>
    %c0_7 = arith.constant 0 : index
    %c0_8 = arith.constant 0 : index
    %15 = vector.load %arg5[%c0_7, %c0_8] : memref<1x128xf32, #tpu.memory_space<vmem>>, vector<1x128xf32>
    %16 = arith.addf %15, %10 : vector<1x128xf32>
    %c0_9 = arith.constant 0 : index
    %c0_10 = arith.constant 0 : index
    %17 = vector.load %arg5[%c0_9, %c0_10] : memref<1x128xf32, #tpu.memory_space<vmem>>, vector<1x128xf32>
    tpu.vector_store %arg5[%c0_9, %c0_10], %16 {strides = array<i32>} : memref<1x128xf32, #tpu.memory_space<vmem>>, vector<1x128xf32>,
    %c0_11 = arith.constant 0 : index
    %c0_12 = arith.constant 0 : index
    %18 = vector.load %arg6[%c0_11, %c0_12] : memref<1x128xf32, #tpu.memory_space<vmem>>, vector<1x128xf32>
    %19 = arith.addf %18, %14 : vector<1x128xf32>
    %c0_13 = arith.constant 0 : index
    %c0_14 = arith.constant 0 : index
    %20 = vector.load %arg6[%c0_13, %c0_14] : memref<1x128xf32, #tpu.memory_space<vmem>>, vector<1x128xf32>
    tpu.vector_store %arg6[%c0_13, %c0_14], %19 {strides = array<i32>} : memref<1x128xf32, #tpu.memory_space<vmem>>, vector<1x128xf32>,
    %c0_i32_15 = arith.constant 0 : i32
    %21 = arith.cmpi eq, %arg1, %c0_i32_15 : i32
    %22 = arith.extui %21 : i1 to i32
    %c0_i32_16 = arith.constant 0 : i32
    %23 = arith.cmpi ne, %22, %c0_i32_16 : i32
    scf.if %23 {
      %c0_17 = arith.constant 0 : index
      %c0_18 = arith.constant 0 : index
      %24 = vector.load %arg5[%c0_17, %c0_18] : memref<1x128xf32, #tpu.memory_space<vmem>>, vector<1x128xf32>
      %c0_19 = arith.constant 0 : index
      %c0_20 = arith.constant 0 : index
      %c0_21 = arith.constant 0 : index
      %25 = vector.load %arg4[%c0_19, %c0_20, %c0_21] : memref<1x2x128xf32, #tpu.memory_space<vmem>>, vector<1x1x128xf32>
      %26 = vector.shape_cast %25 : vector<1x1x128xf32> to vector<1x128xf32>
      %27 = vector.shape_cast %24 : vector<1x128xf32> to vector<1x1x128xf32>
      tpu.vector_store %arg4[%c0_19, %c0_20, %c0_21], %27 {strides = array<i32>} : memref<1x2x128xf32, #tpu.memory_space<vmem>>, vector<1x1x128xf32>,
      %c0_22 = arith.constant 0 : index
      %c0_23 = arith.constant 0 : index
      %28 = vector.load %arg6[%c0_22, %c0_23] : memref<1x128xf32, #tpu.memory_space<vmem>>, vector<1x128xf32>
      %c0_24 = arith.constant 0 : index
      %c1 = arith.constant 1 : index
      %c0_25 = arith.constant 0 : index
      %29 = vector.load %arg4[%c0_24, %c1, %c0_25] : memref<1x2x128xf32, #tpu.memory_space<vmem>>, vector<1x1x128xf32>
      %30 = vector.shape_cast %29 : vector<1x1x128xf32> to vector<1x128xf32>
      %31 = vector.shape_cast %28 : vector<1x128xf32> to vector<1x1x128xf32>
      tpu.vector_store %arg4[%c0_24, %c1, %c0_25], %31 {strides = array<i32>} : memref<1x2x128xf32, #tpu.memory_space<vmem>>, vector<1x1x128xf32>,
    } else {
    }
    return
  }
  func.func @transform_0(%arg0: i32, %arg1: i32) -> (i32, i32) {
    %c1_i32 = arith.constant 1 : i32
    %0 = arith.muli %arg0, %c1_i32 : i32
    %1 = arith.addi %0, %arg1 : i32
    %c0_i32 = arith.constant 0 : i32
    %c0_i32_0 = arith.constant 0 : i32
    return %1, %c0_i32 : i32, i32
  }
  func.func @transform_1(%arg0: i32, %arg1: i32) -> (i32, i32) {
    %c1_i32 = arith.constant 1 : i32
    %0 = arith.muli %arg0, %c1_i32 : i32
    %1 = arith.addi %0, %arg1 : i32
    %c0_i32 = arith.constant 0 : i32
    %c0_i32_0 = arith.constant 0 : i32
    return %1, %c0_i32 : i32, i32
  }
  func.func @transform_2(%arg0: i32, %arg1: i32) -> (i32, i32, i32) {
    %c0_i32 = arith.constant 0 : i32
    %c0_i32_0 = arith.constant 0 : i32
    %c0_i32_1 = arith.constant 0 : i32
    return %arg0, %c0_i32, %c0_i32_0 : i32, i32, i32
  }
}

</mosaic_0001>

<llo_original>
// kernel: tpu_custom_call.1
$region0: #{tpu_custom_call.1}
  #allocation0 [shape = 'u32[]', space=smem, size = 0x4, offset = 0x4, fixed_abs, tag = 'smem constant byte address 0x4 - core index']
  #allocation1 [shape = 'u32[72,128]{1,0:T(1,128)}', space=vmem, size = 0x9000, scoped, tag = 'internal scratch']
  #allocation2 [shape = 'f32[1,128]{1,0:T(1,128)}', space=vmem, size = 0x200, scoped, tag = 'scratch operand']
  #allocation3 [shape = 'f32[1,128]{1,0:T(1,128)}', space=vmem, size = 0x200, scoped, tag = 'scratch operand']
  %s0 = inlined_call_operand.hbm [shape: f32[16,128], index: 0, kind: input, shape index: {}]
  %s1 = inlined_call_operand.hbm [shape: f32[16,128], index: 1, kind: input, shape index: {}]
  %s2 = inlined_call_operand.hbm [shape: f32[1,2,128], index: 2, kind: output, shape index: {}]
  %s3 = sld [smem:[#allocation0]]
  $region34: #{tpu_custom_call.1} parent=0
    _
  %s5 = ssub.s32 1, %s3
  %s6 = scalar_select 0, %s5, %s3
  $region1: #{tpu_custom_call.1} parent=0
    #allocation4 [shape = 'u8[8192]{0}', space=vmem, size = 0x2000, scoped, tag = 'input window, operand 0, single buffered']
    #allocation5 [shape = 's32[1]{0}', space=sflag, size = 0x4, scoped, tag = 'scoped memory for tpu_custom_call.1']
    #allocation6 [shape = 's32[1]{0}', space=sflag, size = 0x4, scoped, tag = 'scoped memory for tpu_custom_call.1']
    #allocation7 [shape = 'u8[8192]{0}', space=vmem, size = 0x2000, scoped, tag = 'input window, operand 1, single buffered']
    #allocation8 [shape = 's32[1]{0}', space=sflag, size = 0x4, scoped, tag = 'scoped memory for tpu_custom_call.1']
    #allocation9 [shape = 'u8[1024]{0}', space=vmem, size = 0x400, scoped, tag = 'output window, operand 0, single buffered']
    %7 = vsyncpa [#allocation5], 0
    %8 = vsyncpa [#allocation8], 0
    %9 = vsyncpa [#allocation6], 0
    // Predicated region
    $region2: #{tpu_custom_call.1} parent=1 // pred_check
      _
    $region3: #{tpu_custom_call.1} parent=1 // pred_check_branch
      %11 = sbr.rel (0) target = $region5
    $region4: #{tpu_custom_call.1} parent=1 // pred_region
      %s12 = sadd.s32 0, 0
      %s13 = smul.u32 2, %s12
      %15 = vsyncadd [#allocation5], 0
      %s16 = smul.addr %s13, 8
      %s17 = scalar_lea.hbm %s0, %s16
      %s18 = sshll.u32 %s17, 4
      %s19 = int_to_ptr.hbm [resolvable:$true] %s18
      %s20 = sshll.u32 [#allocation4], 4
      %s21 = int_to_ptr.vmem [resolvable:$true] %s20
      %26 = dma.hbm_to_vmem [thread:$0]  %s19, 256, %s21, [#allocation5], 128, 128, 8
    $region5: #{tpu_custom_call.1} parent=1 // pred_fallthru
      _
    // Predicated region
    $region6: #{tpu_custom_call.1} parent=1 // pred_check
      _
    $region7: #{tpu_custom_call.1} parent=1 // pred_check_branch
      %28 = sbr.rel (0) target = $region9
    $region8: #{tpu_custom_call.1} parent=1 // pred_region
      %s29 = sadd.s32 0, 0
      %s30 = smul.u32 2, %s29
      %32 = vsyncadd [#allocation8], 0
      %s33 = smul.addr %s30, 8
      %s34 = scalar_lea.hbm %s1, %s33
      %s35 = sshll.u32 %s34, 4
      %s36 = int_to_ptr.hbm [resolvable:$true] %s35
      %s37 = sshll.u32 [#allocation7], 4
      %s38 = int_to_ptr.vmem [resolvable:$true] %s37
      %43 = dma.hbm_to_vmem [thread:$0]  %s36, 256, %s38, [#allocation8], 128, 128, 8
    $region9: #{tpu_custom_call.1} parent=1 // pred_fallthru
      _
    // Predicated region
    $region10: #{tpu_custom_call.1} parent=1 // pred_check
      _
    $region11: #{tpu_custom_call.1} parent=1 // pred_check_branch
      %45 = sbr.rel (0) target = $region13
    $region12: #{tpu_custom_call.1} parent=1 // pred_region
      %47 = dma.done [#allocation5], 256
    $region13: #{tpu_custom_call.1} parent=1 // pred_fallthru
      _
    // Predicated region
    $region14: #{tpu_custom_call.1} parent=1 // pred_check
      _
    $region15: #{tpu_custom_call.1} parent=1 // pred_check_branch
      %49 = sbr.rel (0) target = $region17
    $region16: #{tpu_custom_call.1} parent=1 // pred_region
      %51 = dma.done [#allocation8], 256
    $region17: #{tpu_custom_call.1} parent=1 // pred_fallthru
      _
    %s52 = sadd.s32 0, 0
    %s53 = smul.u32 2, %s52
    %s54 = sadd.s32 0, 0
    %s55 = smul.u32 2, %s54
    %p56 = scmp.eq.s32.totalorder 0, 0
    // Predicated region
    $region18: #{tpu_custom_call.1} parent=1 // pred_check
      %p57 = pneg %p56
    $region19: #{tpu_custom_call.1} parent=1 // pred_check_branch
      %59 = sbr.rel (%p57) target = $region21
    $region20: #{tpu_custom_call.1} parent=1 // pred_region
      %60 = vst [vmem:[#allocation2] sm:$0x1] 0.0
      %61 = vst [vmem:[#allocation3] sm:$0x1] 0.0
    $region21: #{tpu_custom_call.1} parent=1 // pred_fallthru
      _
    %v62 = vld [vmem:[#allocation4] sm:$0xff]
    %v63 = vld [vmem:[#allocation4 + $0x8] sm:$0xff]
    %v64 = vld [vmem:[#allocation7] sm:$0xff]
    %v65 = vld [vmem:[#allocation7 + $0x8] sm:$0xff]
    %v66 = vmul.f32 %v62, %v64
    %v67 = vmul.f32 %v63, %v65
    %v68 = vadd.f32 %v66, %v67
    %v69 = vrot.slane %v68, 4
    %v70 = vadd.f32 %v68, %v69
    %v71 = vrot.slane %v70, 2
    %v72 = vadd.f32 %v70, %v71
    %v73 = vrot.slane %v72, 1
    %v74 = vadd.f32 %v72, %v73
    %v75 = vadd.f32 %v74, 0.0
    %v76 = vadd.f32 %v62, %v64
    %v77 = vadd.f32 %v63, %v65
    %v78 = vadd.f32 %v76, %v77
    %v79 = vrot.slane %v78, 4
    %v80 = vadd.f32 %v78, %v79
    %v81 = vrot.slane %v80, 2
    %v82 = vadd.f32 %v80, %v81
    %v83 = vrot.slane %v82, 1
    %v84 = vadd.f32 %v82, %v83
    %v85 = vadd.f32 %v84, 0.0
    %v86 = vld [vmem:[#allocation2] sm:$0x1]
    %v87 = vadd.f32 %v86, %v75
    %88 = vst [vmem:[#allocation2] sm:$0x1] %v87
    %v89 = vld [vmem:[#allocation3] sm:$0x1]
    %v90 = vadd.f32 %v89, %v85
    %91 = vst [vmem:[#allocation3] sm:$0x1] %v90
    // Predicated region
    $region22: #{tpu_custom_call.1} parent=1 // pred_check
      %p92 = pneg %p56
    $region23: #{tpu_custom_call.1} parent=1 // pred_check_branch
      %94 = sbr.rel (%p92) target = $region25
    $region24: #{tpu_custom_call.1} parent=1 // pred_region
      %v95 = vld [vmem:[#allocation2] sm:$0x1]
      %96 = vst [vmem:[#allocation9] sm:$0x1] %v95
      %v97 = vld [vmem:[#allocation3] sm:$0x1]
      %98 = vst [vmem:[#allocation9 + $0x1] sm:$0x1] %v97
    $region25: #{tpu_custom_call.1} parent=1 // pred_fallthru
      _
    // Predicated region
    $region26: #{tpu_custom_call.1} parent=1 // pred_check
      _
    $region27: #{tpu_custom_call.1} parent=1 // pred_check_branch
      %100 = sbr.rel (0) target = $region29
    $region28: #{tpu_custom_call.1} parent=1 // pred_region
      %102 = vsyncadd [#allocation6], 0
      %s104 = sshll.u32 [#allocation9], 4
      %s105 = int_to_ptr.vmem [resolvable:$true] %s104
      %s106 = sshll.u32 %s2, 4
      %s107 = int_to_ptr.hbm [resolvable:$true] %s106
      %109 = dma.vmem_to_hbm [thread:$0]  %s105, 32, %s107, [#allocation6]
    $region29: #{tpu_custom_call.1} parent=1 // pred_fallthru
      _
    // Predicated region
    $region30: #{tpu_custom_call.1} parent=1 // pred_check
      _
    $region31: #{tpu_custom_call.1} parent=1 // pred_check_branch
      %111 = sbr.rel (0) target = $region33
    $region32: #{tpu_custom_call.1} parent=1 // pred_region
      %113 = dma.done [#allocation6], 32
    $region33: #{tpu_custom_call.1} parent=1 // pred_fallthru
      _
    %114 = vsyncpa [#allocation5], 1
    %115 = vsyncpa [#allocation8], 1
    %116 = vsyncpa [#allocation6], 1

</llo_original>
